<compile_context>
chip_gen: v7x
topology: tpu7x:2x2x1
jax: 0.10.0
libtpu: 0.0.40
codegen_flags: <defaults>
</compile_context>

<pallas_src>
import jax
import jax.numpy as jnp
from jax.experimental import pallas as pl
from jax.experimental.pallas import tpu as pltpu


def _node_conv_attn_kernel(adj_ref, node_ref, w_ref, out_ref):
    # adj_ref : (Bb, 1,    BI)   row-flattened adj tile (lane-dense)
    # node_ref: (Bb, nin,  W )   native NCW node features
    # w_ref   : (nout, nin)      native Conv2d weight (o, c)
    # out_ref : (Bb, nout, BI)   NCHW-flattened output tile (lane-dense)
    Bb = node_ref.shape[0]
    W = node_ref.shape[2]
    BI = out_ref.shape[2]
    reps = BI // W                                   # number of i-rows in this tile

    w = w_ref[...].astype(jnp.float32)               # (nout, nin), tiny

    for b in range(Bb):                              # Bb is a small static int
        node_b = node_ref[b].astype(jnp.float32)     # (nin, W)
        # 1x1 conv channel mix: yT[o, j] = sum_c w[o, c] * node[b, c, j]
        yT = jnp.dot(w, node_b, preferred_element_type=jnp.float32)   # (nout, W)
        # out[o, i*W + j] = adj[i*W + j] * yT[o, j]
        y_rows = jnp.tile(yT, (1, reps))             # (nout, BI) lane-tiled
        adj_b = adj_ref[b].astype(jnp.float32)       # (1, BI) -> sublane broadcast
        out_ref[b] = (y_rows * adj_b).astype(out_ref.dtype)


_TARGET_BLOCK_BYTES = 4 * 1024 * 1024   # per output block (double-buffered -> ~8 MiB)


def _choose_blocks(B, W, nout, out_itemsize):
    """Pick (block_b, block_i) so blocks are large but VMEM-safe on v5e/v6e/v7x."""
    row_bytes = nout * W * out_itemsize              # one i-row of one batch of output

    # i-axis tiling for large W so the double-buffered output block stays small.
    block_i = W
    if row_bytes * W > _TARGET_BLOCK_BYTES:
        cands = [d for d in range(1, W) if W % d == 0 and (d * W) % 128 == 0]
        fitting = [d for d in cands if row_bytes * d <= _TARGET_BLOCK_BYTES]
        if fitting:
            block_i = max(fitting)
        elif cands:
            block_i = min(cands)

    # Batch folding only when a full-W step is still tiny; keep >= 2 grid steps
    # (v7x has 2 TensorCores) and cap the static unroll inside the kernel.
    block_b = 1
    if block_i == W:
        step_bytes = max(row_bytes * W, 1)
        block_b = max(1, min(B // 2, _TARGET_BLOCK_BYTES // step_bytes, 8))
        while block_b > 1 and B % block_b:
            block_b -= 1
    return int(block_b), int(block_i)


def node_conv_attn(adj, node, weight, *,
                   input_dtype=jnp.float32, out_dtype=jnp.float32):
    """adj: (B,1,W,W), node: (B,nin,W), weight: (nout,nin,1,1) -> (B,nout,W,W)."""
    B, _, W, _ = adj.shape
    nin = node.shape[1]
    nout = weight.shape[0]
    WW = W * W

    # Free metadata reshape (adj is contiguous NCHW); lane-dense input.
    adj_k = adj.reshape(B, 1, WW).astype(input_dtype)        # (B, 1, W*W)
    node_k = node.astype(input_dtype)                        # (B, nin, W) native
    w_k = weight[:, :, 0, 0].astype(input_dtype)             # (nout, nin) native

    block_b, block_i = _choose_blocks(B, W, nout, jnp.dtype(out_dtype).itemsize)
    BI = block_i * W
    grid = (B // block_b, W // block_i)

    out_k = pl.pallas_call(
        _node_conv_attn_kernel,
        out_shape=jax.ShapeDtypeStruct((B, nout, WW), out_dtype),
        grid_spec=pltpu.PrefetchScalarGridSpec(
            num_scalar_prefetch=0,
            grid=grid,
            in_specs=[
                pl.BlockSpec((block_b, 1, BI), lambda b, it: (b, 0, it)),
                pl.BlockSpec((block_b, nin, W), lambda b, it: (b, 0, 0)),
                pl.BlockSpec((nout, nin), lambda b, it: (0, 0)),
            ],
            out_specs=pl.BlockSpec((block_b, nout, BI), lambda b, it: (b, 0, it)),
        ),
        compiler_params=pltpu.CompilerParams(
            dimension_semantics=("parallel", "parallel"),
            vmem_limit_bytes=32 * 1024 * 1024,
        ),
    )(adj_k, node_k, w_k)

    # Free metadata reshape back to NCHW (no transpose, no HBM round-trip).
    return out_k.reshape(B, nout, W, W)


def node_conv_attn_ref(adj, node, weight):
    """Pure-JAX reference matching the literal PyTorch forward."""
    B, _, W, _ = adj.shape
    nin = node.shape[1]
    adj_r = jnp.tile(adj, (1, nin, 1, 1))                    # (B, nin, W, W)
    node_r = jnp.tile(node[:, :, None, :], (1, 1, W, 1))     # (B, nin, W, W)
    prod = node_r * adj_r
    return jnp.einsum("bchw,oc->bohw", prod, weight[:, :, 0, 0])


if __name__ == "__main__":
    B, nin, nout, W = 2, 4, 8, 16

    key = jax.random.PRNGKey(0)
    k_adj, k_node, k_w = jax.random.split(key, 3)

    adj = jax.random.uniform(k_adj, (B, 1, W, W), dtype=jnp.float32)
    node = jax.random.normal(k_node, (B, nin, W), dtype=jnp.float32)

    # deterministic Conv2d-style init: uniform(-1/sqrt(nin), 1/sqrt(nin))
    bound = 1.0 / (nin ** 0.5)
    weight = jax.random.uniform(
        k_w, (nout, nin, 1, 1), dtype=jnp.float32, minval=-bound, maxval=bound
    )

    ref = jax.block_until_ready(node_conv_attn_ref(adj, node, weight))

    # f32 path (bit-faithful to the PyTorch module, tight tolerance)
    out = jax.block_until_ready(node_conv_attn(adj, node, weight))
    assert out.shape == (B, nout, W, W), out.shape
    assert jnp.allclose(out, ref, atol=1e-4, rtol=1e-4), float(
        jnp.max(jnp.abs(out - ref))
    )

    # bf16-input path (v6e/v7x bandwidth optimization), f32 accumulation/output
    out_bf16 = jax.block_until_ready(
        node_conv_attn(adj, node, weight, input_dtype=jnp.bfloat16)
    )
    assert jnp.allclose(out_bf16, ref, atol=5e-2, rtol=5e-2), float(
        jnp.max(jnp.abs(out_bf16 - ref))
    )

    print("KERNEL_OK")
</pallas_src>

<mosaic_0001>
module attributes {stable_mosaic.version = 11 : i64} {
  func.func @_node_conv_attn_kernel(%arg0: i32, %arg1: i32, %arg2: memref<1x1x256xf32, #tpu.memory_space<vmem>>, %arg3: memref<1x4x16xf32, #tpu.memory_space<vmem>>, %arg4: memref<8x4xf32, #tpu.memory_space<vmem>>, %arg5: memref<1x8x256xf32, #tpu.memory_space<vmem>>) attributes {dimension_semantics = [#tpu.dimension_semantics<parallel>, #tpu.dimension_semantics<parallel>], iteration_bounds = array<i64: 2, 1>, scalar_prefetch = 0 : i64, scratch_operands = 0 : i64, tpu.core_type = #tpu.core_type<tc>, window_params = [{transform_indices = @transform_0, window_bounds = array<i64: 1, 1, 256>}, {transform_indices = @transform_1, window_bounds = array<i64: 1, 4, 16>}, {pipeline_mode = #tpu.pipeline_mode<synchronous>, transform_indices = @transform_2, window_bounds = array<i64: 8, 4>}, {transform_indices = @transform_3, window_bounds = array<i64: 1, 8, 256>}]} {
    %c0 = arith.constant 0 : index
    %c0_0 = arith.constant 0 : index
    %0 = vector.load %arg4[%c0, %c0_0] : memref<8x4xf32, #tpu.memory_space<vmem>>, vector<8x4xf32>
    %c0_1 = arith.constant 0 : index
    %c0_2 = arith.constant 0 : index
    %c0_3 = arith.constant 0 : index
    %1 = vector.load %arg3[%c0_1, %c0_2, %c0_3] : memref<1x4x16xf32, #tpu.memory_space<vmem>>, vector<1x4x16xf32>
    %2 = vector.shape_cast %1 : vector<1x4x16xf32> to vector<4x16xf32>
    %cst = arith.constant dense<0.000000e+00> : vector<8x16xf32>
    %3 = tpu.matmul %0, %2, %cst {dimension_numbers = #tpu.dot_dimension_numbers<[1], [0], [0], [1], [0, 0, 1, 1], [], []>} : vector<8x4xf32>, vector<4x16xf32>, vector<8x16xf32> -> vector<8x16xf32>
    %4 = tpu.concatenate %3, %3, %3, %3, %3, %3, %3, %3, %3, %3, %3, %3, %3, %3, %3, %3 in 1 : vector<8x16xf32>, vector<8x16xf32>, vector<8x16xf32>, vector<8x16xf32>, vector<8x16xf32>, vector<8x16xf32>, vector<8x16xf32>, vector<8x16xf32>, vector<8x16xf32>, vector<8x16xf32>, vector<8x16xf32>, vector<8x16xf32>, vector<8x16xf32>, vector<8x16xf32>, vector<8x16xf32>, vector<8x16xf32> -> vector<8x256xf32>
    %c0_4 = arith.constant 0 : index
    %c0_5 = arith.constant 0 : index
    %c0_6 = arith.constant 0 : index
    %5 = vector.load %arg2[%c0_4, %c0_5, %c0_6] : memref<1x1x256xf32, #tpu.memory_space<vmem>>, vector<1x1x256xf32>
    %6 = vector.shape_cast %5 : vector<1x1x256xf32> to vector<1x256xf32>
    %7 = vector.broadcast %6 : vector<1x256xf32> to vector<8x256xf32>
    %8 = arith.mulf %4, %7 : vector<8x256xf32>
    %c0_7 = arith.constant 0 : index
    %c0_8 = arith.constant 0 : index
    %c0_9 = arith.constant 0 : index
    %9 = vector.load %arg5[%c0_7, %c0_8, %c0_9] : memref<1x8x256xf32, #tpu.memory_space<vmem>>, vector<1x8x256xf32>
    %10 = vector.shape_cast %9 : vector<1x8x256xf32> to vector<8x256xf32>
    %11 = vector.shape_cast %8 : vector<8x256xf32> to vector<1x8x256xf32>
    tpu.vector_store %arg5[%c0_7, %c0_8, %c0_9], %11 {strides = array<i32>} : memref<1x8x256xf32, #tpu.memory_space<vmem>>, vector<1x8x256xf32>,
    return
  }
  func.func @transform_0(%arg0: i32, %arg1: i32) -> (i32, i32, i32) {
    %c0_i32 = arith.constant 0 : i32
    %c0_i32_0 = arith.constant 0 : i32
    return %arg0, %c0_i32, %arg1 : i32, i32, i32
  }
  func.func @transform_1(%arg0: i32, %arg1: i32) -> (i32, i32, i32) {
    %c0_i32 = arith.constant 0 : i32
    %c0_i32_0 = arith.constant 0 : i32
    %c0_i32_1 = arith.constant 0 : i32
    return %arg0, %c0_i32, %c0_i32_0 : i32, i32, i32
  }
  func.func @transform_2(%arg0: i32, %arg1: i32) -> (i32, i32) {
    %c0_i32 = arith.constant 0 : i32
    %c0_i32_0 = arith.constant 0 : i32
    %c0_i32_1 = arith.constant 0 : i32
    return %c0_i32, %c0_i32_0 : i32, i32
  }
  func.func @transform_3(%arg0: i32, %arg1: i32) -> (i32, i32, i32) {
    %c0_i32 = arith.constant 0 : i32
    %c0_i32_0 = arith.constant 0 : i32
    return %arg0, %c0_i32, %arg1 : i32, i32, i32
  }
}

</mosaic_0001>

<llo_original>
// kernel: tpu_custom_call.1
$region0: #{tpu_custom_call.1}
  #allocation0 [shape = 'u32[]', space=smem, size = 0x4, offset = 0x4, fixed_abs, tag = 'smem constant byte address 0x4 - core index']
  #allocation1 [shape = 'u32[144,128]{1,0:T(1,128)}', space=vmem, size = 0x12000, scoped, tag = 'internal scratch']
  %s0 = inlined_call_operand.vmem [shape: f32[2,1,256], index: 0, kind: input, shape index: {}]
  %s1 = inlined_call_operand.vmem [shape: f32[2,4,16], index: 1, kind: input, shape index: {}]
  %s2 = inlined_call_operand.vmem [shape: f32[8,4], index: 2, kind: input, shape index: {}]
  %s3 = inlined_call_operand.hbm [shape: f32[2,8,256], index: 3, kind: output, shape index: {}]
  %s4 = sld [smem:[#allocation0]]
  $region45: #{tpu_custom_call.1} parent=0
    _
  %s6 = ssub.s32 1, %s4
  %s7 = scalar_select 0, %s6, %s4
  $region1: #{tpu_custom_call.1} parent=0
    #allocation2 [shape = 'u8[16384]{0}', space=vmem, size = 0x4000, scoped, tag = 'output window, operand 0']
    #allocation3 [shape = 's32[2]{0}', space=sflag, size = 0x8, scoped, tag = 'scoped memory for tpu_custom_call.1']
    %8 = vsyncpa [#allocation3], 0
    %s9 = scalar_lea.sflag [#allocation3], 1
    %10 = vsyncpa %s9, 0
    loop: start=0, step=1, limit=4
    $region2: #{tpu_custom_call.1} parent=1 // loop_pre_header
      _
    $region3: #{tpu_custom_call.1} parent=1 // loop_header
      %s12 = sphi 0, %s16
      %p13 = scmp.ge.s32.totalorder %s12, 4
      %s19 = sphi 0, %s31
      %s20 = sphi 0, %s27
      %s21 = sphi 0, %s19
      %s22 = sphi 0, %s20
      %s23 = sphi 0, %s21
      %s24 = sphi 0, %s22
      %s36 = sphi 0, %s38
      %s39 = sphi 0, %s36
      %s40 = sphi 0, %s39
      %s56 = sphi 0, %s40
      %s62 = sphi 0, %s64
      %s65 = sphi 0, %s62
      %s66 = sphi 0, %s65
      %s82 = sphi 0, %s66
      %s86 = sphi 0, %s86
      %s88 = sphi 0, %s86
      %s89 = sphi 0, %s88
      %s103 = sphi 0, %s89
      %s111 = sphi 0, %s113
      %s114 = sphi 0, %s111
      %s115 = sphi 0, %s114
      %s131 = sphi 0, %s115
    $region4: #{tpu_custom_call.1} parent=1 // loop_header_branch
      %15 = sbr.rel (%p13) target = $region8
    $region5: #{tpu_custom_call.1} parent=1 // loop_body
      %s17 = ssub.s32 %s12, 1
      %s18 = ssub.s32 %s12, 2
      %s25 = sadd.s32 1, %s20
      %p26 = scmp.ge.s32.totalorder %s25, 1
      %s27 = scalar_select %p26, 0, %s25
      %s28 = sadd.s32 1, %s19
      %s29 = scalar_select %p26, %s28, %s19
      %p30 = scmp.ge.s32.totalorder %s29, 2
      %s31 = scalar_select %p30, 0, %s29
      %s32 = ssub.s32 %s19, %s31
      %s33 = ssub.s32 %s20, %s27
      %s34 = sor.u32 %s32, %s33
      %p35 = scmp.eq.s32.totalorder %s34, 0
      %s37 = sadd.s32 %s36, 1
      %s38 = scalar_select %p35, %s36, %s37
      %p41 = pneg %p35
      %p42 = scmp.eq.s32.totalorder %s12, 1
      %p43 = por %p41, %p42
      %p44 = scmp.ne.s32.totalorder %s36, %s39
      %p45 = scmp.eq.s32.totalorder %s12, 0
      %p46 = por %p44, %p45
      %p47 = scmp.ne.s32.totalorder %s36, %s39
      %p48 = scmp.eq.s32.totalorder %s17, 1
      %p49 = por %p47, %p48
      %p50 = scmp.ne.s32.totalorder %s39, %s40
      %p51 = scmp.eq.s32.totalorder %s17, 0
      %p52 = por %p50, %p51
      %p53 = scmp.ne.s32.totalorder %s39, %s40
      %p54 = scmp.eq.s32.totalorder %s18, 1
      %p55 = por %p53, %p54
      %p57 = scmp.ne.s32.totalorder %s40, %s56
      %p58 = scmp.eq.s32.totalorder %s18, 0
      %p59 = por %p57, %p58
      %s60 = ssub.s32 %s19, %s31
      %p61 = scmp.eq.s32.totalorder %s60, 0
      %s63 = sadd.s32 %s62, 1
      %s64 = scalar_select %p61, %s62, %s63
      %p67 = pneg %p61
      %p68 = scmp.eq.s32.totalorder %s12, 1
      %p69 = por %p67, %p68
      %p70 = scmp.ne.s32.totalorder %s62, %s65
      %p71 = scmp.eq.s32.totalorder %s12, 0
      %p72 = por %p70, %p71
      %p73 = scmp.ne.s32.totalorder %s62, %s65
      %p74 = scmp.eq.s32.totalorder %s17, 1
      %p75 = por %p73, %p74
      %p76 = scmp.ne.s32.totalorder %s65, %s66
      %p77 = scmp.eq.s32.totalorder %s17, 0
      %p78 = por %p76, %p77
      %p79 = scmp.ne.s32.totalorder %s65, %s66
      %p80 = scmp.eq.s32.totalorder %s18, 1
      %p81 = por %p79, %p80
      %p83 = scmp.ne.s32.totalorder %s66, %s82
      %p84 = scmp.eq.s32.totalorder %s18, 0
      %p85 = por %p83, %p84
      %s87 = sadd.s32 %s86, 1
      %p90 = scmp.eq.s32.totalorder %s12, 1
      %p91 = scmp.ne.s32.totalorder %s86, %s88
      %p92 = scmp.eq.s32.totalorder %s12, 0
      %p93 = por %p91, %p92
      %p94 = scmp.ne.s32.totalorder %s86, %s88
      %p95 = scmp.eq.s32.totalorder %s17, 1
      %p96 = por %p94, %p95
      %p97 = scmp.ne.s32.totalorder %s88, %s89
      %p98 = scmp.eq.s32.totalorder %s17, 0
      %p99 = por %p97, %p98
      %p100 = scmp.ne.s32.totalorder %s88, %s89
      %p101 = scmp.eq.s32.totalorder %s18, 1
      %p102 = por %p100, %p101
      %p104 = scmp.ne.s32.totalorder %s89, %s103
      %p105 = scmp.eq.s32.totalorder %s18, 0
      %p106 = por %p104, %p105
      %s107 = ssub.s32 %s19, %s31
      %s108 = ssub.s32 %s20, %s27
      %s109 = sor.u32 %s107, %s108
      %p110 = scmp.eq.s32.totalorder %s109, 0
      %s112 = sadd.s32 %s111, 1
      %s113 = scalar_select %p110, %s111, %s112
      %p116 = pneg %p110
      %p117 = scmp.eq.s32.totalorder %s12, 1
      %p118 = por %p116, %p117
      %p119 = scmp.ne.s32.totalorder %s111, %s114
      %p120 = scmp.eq.s32.totalorder %s12, 0
      %p121 = por %p119, %p120
      %p122 = scmp.ne.s32.totalorder %s111, %s114
      %p123 = scmp.eq.s32.totalorder %s17, 1
      %p124 = por %p122, %p123
      %p125 = scmp.ne.s32.totalorder %s114, %s115
      %p126 = scmp.eq.s32.totalorder %s17, 0
      %p127 = por %p125, %p126
      %p128 = scmp.ne.s32.totalorder %s114, %s115
      %p129 = scmp.eq.s32.totalorder %s18, 1
      %p130 = por %p128, %p129
      %p132 = scmp.ne.s32.totalorder %s115, %s131
      %p133 = scmp.eq.s32.totalorder %s18, 0
      %p134 = por %p132, %p133
      %p135 = scmp.le.s32.totalorder 1, %s12
      %p136 = scmp.lt.s32.totalorder %s12, 3
      %p137 = pnand %p135, %p136
      %p138 = pneg %p137
      // Predicated region
      $region9: #{tpu_custom_call.1} parent=5 // pred_check
        _
      $region10: #{tpu_custom_call.1} parent=5 // pred_check_branch
        %140 = sbr.rel (%p137) target = $region12
      $region11: #{tpu_custom_call.1} parent=5 // pred_region
        %s141 = ssub.s32 %s12, 1
        // Predicated region
        $region13: #{tpu_custom_call.1} parent=11 // pred_check
          %p142 = pneg %p99
        $region14: #{tpu_custom_call.1} parent=11 // pred_check_branch
          %144 = sbr.rel (%p142) target = $region16
        $region15: #{tpu_custom_call.1} parent=11 // pred_region
          _
        $region16: #{tpu_custom_call.1} parent=11 // pred_fallthru
          _
      $region12: #{tpu_custom_call.1} parent=5 // pred_fallthru
        _
      %p145 = scmp.lt.s32.totalorder %s12, 2
      // Predicated region
      $region17: #{tpu_custom_call.1} parent=5 // pred_check
        %p146 = pneg %p145
      $region18: #{tpu_custom_call.1} parent=5 // pred_check_branch
        %148 = sbr.rel (%p146) target = $region20
      $region19: #{tpu_custom_call.1} parent=5 // pred_region
        // Predicated region
        $region21: #{tpu_custom_call.1} parent=19 // pred_check
          %p149 = pneg %p46
        $region22: #{tpu_custom_call.1} parent=19 // pred_check_branch
          %151 = sbr.rel (%p149) target = $region24
        $region23: #{tpu_custom_call.1} parent=19 // pred_region
          %s152 = smul.u32 2, %s20
          %p153 = scmp.lt.s32.totalorder %s19, 1
          %s154 = scalar_select %p153, %s19, 1
          %p155 = scmp.lt.s32.totalorder %s152, 1
          %s156 = scalar_select %p155, %s152, 1
          %s157 = smul.addr %s154, 2
          %s158 = sadd.s32 %s156, %s157
          %s159 = scalar_lea.vmem %s0, %s158
          %s160 = smul.u32 2, %s20
        $region24: #{tpu_custom_call.1} parent=19 // pred_fallthru
          _
        // Predicated region
        $region25: #{tpu_custom_call.1} parent=19 // pred_check
          %p161 = pneg %p72
        $region26: #{tpu_custom_call.1} parent=19 // pred_check_branch
          %163 = sbr.rel (%p161) target = $region28
        $region27: #{tpu_custom_call.1} parent=19 // pred_region
          %p164 = scmp.lt.s32.totalorder %s19, 1
          %s165 = scalar_select %p164, %s19, 1
          %s166 = smul.addr %s165, 4
          %s167 = scalar_lea.vmem %s1, %s166
        $region28: #{tpu_custom_call.1} parent=19 // pred_fallthru
          _
      $region20: #{tpu_custom_call.1} parent=5 // pred_fallthru
        _
      %p168 = scmp.le.s32.totalorder 1, %s12
      %p169 = scmp.lt.s32.totalorder %s12, 3
      %p170 = pnand %p168, %p169
      %p171 = pneg %p170
      // Predicated region
      $region29: #{tpu_custom_call.1} parent=5 // pred_check
        _
      $region30: #{tpu_custom_call.1} parent=5 // pred_check_branch
        %173 = sbr.rel (%p170) target = $region32
      $region31: #{tpu_custom_call.1} parent=5 // pred_region
        %s174 = ssub.s32 %s12, 1
        %s175 = smul.u32 2, %s22
        %p176 = scmp.lt.s32.totalorder %s21, 1
        %s177 = scalar_select %p176, %s21, 1
        %p178 = scmp.lt.s32.totalorder %s175, 1
        %s179 = scalar_select %p178, %s175, 1
        %s180 = smul.addr %s177, 2
        %s181 = sadd.s32 %s179, %s180
        %s182 = scalar_lea.vmem %s0, %s181
        %p183 = pneg %p52
        %p184 = pneg %p49
        %p185 = scmp.lt.s32.totalorder %s21, 1
        %s186 = scalar_select %p185, %s21, 1
        %s187 = smul.addr %s186, 4
        %s188 = scalar_lea.vmem %s1, %s187
        %p189 = pneg %p78
        %p190 = pneg %p75
        %p191 = pneg %p99
        %p192 = pneg %p96
        %p193 = pneg %p127
        %p194 = pneg %p124
        %s195 = sand.u32 %s114, 1
        %s196 = scalar_lea.sflag [#allocation3], %s195
        %s197 = sand.u32 %s114, 1
        %s198 = smul.addr %s197, 16
        %s199 = scalar_lea.vmem [#allocation2], %s198
        %s200 = smul.u32 2, %s22
        %p201 = scmp.lt.s32.totalorder %s21, 1
        %s202 = scalar_select %p201, %s21, 1
        %p203 = scmp.lt.s32.totalorder %s200, 1
        %s204 = scalar_select %p203, %s200, 1
        %s205 = smul.addr %s202, 2
        %s206 = sadd.s32 %s204, %s205
        %s207 = scalar_lea.vmem %s0, %s206
        %s208 = smul.u32 2, %s22
        %p209 = scmp.lt.s32.totalorder %s21, 1
        %s210 = scalar_select %p209, %s21, 1
        %s211 = smul.addr %s210, 4
        %s212 = scalar_lea.vmem %s1, %s211
        %s213 = smul.u32 2, %s22
        %v214 = vld [vmem:[%s2] sm:$0xff]
        %v215 = vld [vmem:[%s212] sm:$0xf]
        %vm216 = vcmask 31744
        %v218 = vsel %vm216, %v214, 0
        %vm220 = vcmask 1043456
        %v222 = vsel %vm220, %v215, 0
        %224 = vmatprep.subr.mxu0 0.0
        %225 = vmatpush1.msra.mxu0 %v222
        %226 = vmatprep.subr.mxu0 0.0
        %227 = vmatpush1.msra.mxu0 0.0
        %228 = vmatprep.subr.mxu0 0.0
        %229 = vmatpush1.msra.mxu0 0.0
        %230 = vmatprep.subr.mxu0 0.0
        %231 = vmatpush1.msra.mxu0 0.0
        %232 = vmatprep.subr.mxu0 0.0
        %233 = vmatpush1.msra.mxu0 0.0
        %234 = vmatprep.subr.mxu0 0.0
        %235 = vmatpush1.msra.mxu0 0.0
        %236 = vmatprep.subr.mxu0 0.0
        %237 = vmatpush1.msra.mxu0 0.0
        %238 = vmatprep.subr.mxu0 0.0
        %239 = vmatpush1.msra.mxu0 0.0
        %240 = vmatprep.subr.mxu0 0.0
        %241 = vmatpush1.msra.mxu0 0.0
        %242 = vmatprep.subr.mxu0 0.0
        %243 = vmatpush1.msra.mxu0 0.0
        %244 = vmatprep.subr.mxu0 0.0
        %245 = vmatpush1.msra.mxu0 0.0
        %246 = vmatprep.subr.mxu0 0.0
        %247 = vmatpush1.msra.mxu0 0.0
        %248 = vmatprep.subr.mxu0 0.0
        %249 = vmatpush1.msra.mxu0 0.0
        %250 = vmatprep.subr.mxu0 0.0
        %251 = vmatpush1.msra.mxu0 0.0
        %252 = vmatprep.subr.mxu0 0.0
        %253 = vmatpush1.msra.mxu0 0.0
        %254 = vmatprep.subr.mxu0 0.0
        %255 = vmatpush1.msra.mxu0 0.0
        %256 = vmatprep.subr.mxu0 0.0
        %257 = vmatpush1.msra.mxu0 0.0
        %258 = vmatprep.subr.mxu0 0.0
        %259 = vmatpush1.msra.mxu0 0.0
        %260 = vmatprep.subr.mxu0 0.0
        %261 = vmatpush1.msra.mxu0 0.0
        %262 = vmatprep.subr.mxu0 0.0
        %263 = vmatpush1.msra.mxu0 0.0
        %264 = vmatprep.subr.mxu0 0.0
        %265 = vmatpush1.msra.mxu0 0.0
        %266 = vmatprep.subr.mxu0 0.0
        %267 = vmatpush1.msra.mxu0 0.0
        %268 = vmatprep.subr.mxu0 0.0
        %269 = vmatpush1.msra.mxu0 0.0
        %270 = vmatprep.subr.mxu0 0.0
        %271 = vmatpush1.msra.mxu0 0.0
        %272 = vmatprep.subr.mxu0 0.0
        %273 = vmatpush1.msra.mxu0 0.0
        %274 = vmatprep.subr.mxu0 0.0
        %275 = vmatpush1.msra.mxu0 0.0
        %276 = vmatprep.subr.mxu0 0.0
        %277 = vmatpush1.msra.mxu0 0.0
        %278 = vmatprep.subr.mxu0 0.0
        %279 = vmatpush1.msra.mxu0 0.0
        %280 = vmatprep.subr.mxu0 0.0
        %281 = vmatpush1.msra.mxu0 0.0
        %282 = vmatprep.subr.mxu0 0.0
        %283 = vmatpush1.msra.mxu0 0.0
        %284 = vmatprep.subr.mxu0 0.0
        %285 = vmatpush1.msra.mxu0 0.0
        %286 = vmatprep.subr.mxu0 0.0
        %287 = vmatpush1.msra.mxu0 0.0
        %288 = vmatprep.mubr.f32.mxu0 0.0
        %289 = vmatmul.mubr.f32.gmra.mrb[0].mxu0 %v218
        %v290 = vpop.f32.mrb[0].mxu0
        %v291 = vadd.f32 0.0, %v290
        %v292 = vpop.f32.mrb[0].mxu0
        %293 = vdwg.mxu0
        %295 = vrot.lane.b32.xlu0 %v291, 16
        %v296 = vpop.permute.xlu0 %295
        %298 = vrot.lane.b32.xlu0 %v291, 32
        %v299 = vpop.permute.xlu0 %298
        %301 = vrot.lane.b32.xlu0 %v291, 48
        %v302 = vpop.permute.xlu0 %301
        %304 = vrot.lane.b32.xlu0 %v291, 64
        %v305 = vpop.permute.xlu0 %304
        %307 = vrot.lane.b32.xlu0 %v291, 80
        %v308 = vpop.permute.xlu0 %307
        %310 = vrot.lane.b32.xlu0 %v291, 96
        %v311 = vpop.permute.xlu0 %310
        %313 = vrot.lane.b32.xlu0 %v291, 112
        %v314 = vpop.permute.xlu0 %313
        %vm316 = vcmask 130048
        %v317 = vsel %vm316, %v291, %v296
        %vm318 = vcmask 261120
        %v319 = vsel %vm318, %v317, %v299
        %vm320 = vcmask 392192
        %v321 = vsel %vm320, %v319, %v302
        %vm322 = vcmask 523264
        %v323 = vsel %vm322, %v321, %v305
        %vm324 = vcmask 654336
        %v325 = vsel %vm324, %v323, %v308
        %vm326 = vcmask 785408
        %v327 = vsel %vm326, %v325, %v311
        %vm328 = vcmask 916480
        %v329 = vsel %vm328, %v327, %v314
        %v330 = vld [vmem:[%s207] sm:$0x3]
        %v332 = vlaneseq
        %v333 = vshrl.u32 %v332, 7
        %v334 = vsub.s32 0, %v333
        %v335 = vrot.slane %v330, %v334
        %v336 = vlaneseq
        %v337 = vshrl.u32 %v336, 7
        %v338 = vsub.s32 1, %v337
        %v339 = vrot.slane %v330, %v338
        %v342 = vmul.f32 %v329, %v335
        %v343 = vmul.f32 %v329, %v339
        %344 = vst [vmem:[%s199] sm:$0xff] %v342
        %345 = vst [vmem:[%s199 + $0x8] sm:$0xff] %v343
        %s346 = sand.u32 %s114, 1
        %s347 = scalar_lea.sflag [#allocation3], %s346
        %s348 = sand.u32 %s114, 1
        %s349 = smul.addr %s348, 16
        %s350 = scalar_lea.vmem [#allocation2], %s349
        // Predicated region
        $region33: #{tpu_custom_call.1} parent=31 // pred_check
          %p351 = pneg %p124
        $region34: #{tpu_custom_call.1} parent=31 // pred_check_branch
          %353 = sbr.rel (%p351) target = $region36
        $region35: #{tpu_custom_call.1} parent=31 // pred_region
          %s354 = smul.u32 2, %s22
          %s356 = ssub.s32 256, 256
          %357 = vsyncadd %s347, %s356
          %s358 = smul.addr %s21, 2
          %s359 = sadd.s32 %s354, %s358
          %s360 = smul.addr %s359, 128
          %s361 = scalar_lea.hbm %s3, %s360
          %s363 = sshll.u32 %s350, 4
          %s364 = int_to_ptr.vmem [resolvable:$true] %s363
          %366 = dma.vmem_to_hbm [thread:$0]  %s364, 256, %s361, %s347
        $region36: #{tpu_custom_call.1} parent=31 // pred_fallthru
          _
      $region32: #{tpu_custom_call.1} parent=5 // pred_fallthru
        _
      %p367 = scmp.le.s32.totalorder 2, %s12
      // Predicated region
      $region37: #{tpu_custom_call.1} parent=5 // pred_check
        %p368 = pneg %p367
      $region38: #{tpu_custom_call.1} parent=5 // pred_check_branch
        %370 = sbr.rel (%p368) target = $region40
      $region39: #{tpu_custom_call.1} parent=5 // pred_region
        %s371 = ssub.s32 %s12, 2
        // Predicated region
        $region41: #{tpu_custom_call.1} parent=39 // pred_check
          %p372 = pneg %p130
        $region42: #{tpu_custom_call.1} parent=39 // pred_check_branch
          %374 = sbr.rel (%p372) target = $region44
        $region43: #{tpu_custom_call.1} parent=39 // pred_region
          %s375 = sand.u32 %s115, 1
          %s376 = scalar_lea.sflag [#allocation3], %s375
          %s377 = sand.u32 %s115, 1
          %s378 = smul.addr %s377, 16
          %s379 = scalar_lea.vmem [#allocation2], %s378
          %380 = dma.done %s376, 256
        $region44: #{tpu_custom_call.1} parent=39 // pred_fallthru
          _
      $region40: #{tpu_custom_call.1} parent=5 // pred_fallthru
        _
    $region6: #{tpu_custom_call.1} parent=1 // loop_footer
      %s16 = sadd.s32 1, %s12
    $region7: #{tpu_custom_call.1} parent=1 // loop_footer_branch
      %11 = sbr.rel target = $region3
    $region8: #{tpu_custom_call.1} parent=1 // loop_exit
      _
    %381 = vsyncpa [#allocation3], 1
    %s382 = scalar_lea.sflag [#allocation3], 1
    %383 = vsyncpa %s382, 1

</llo_original>
